<compile_context>
chip_gen: v7x
topology: tpu7x:2x2x1
jax: 0.10.0
libtpu: 0.0.40
codegen_flags: <defaults>
</compile_context>

<pallas_src>
import jax
import jax.numpy as jnp
from jax.experimental import pallas as pl
from jax.experimental.pallas import tpu as pltpu

_LANES = 128
_SUBLANES = 8
_NUM_CORES = 2   # megacore sharding on v7x; harmless on single-TC chips
_MAX_ROWS_PER_TILE = 64  # 64 * 128 = 8192 lanes per block


def _round_up(x: int, m: int) -> int:
    return ((x + m - 1) // m) * m


def _epe_partial_kernel(out_ref, tgt_ref, part_ref, acc_ref):
    """Accumulates per-(row, lane) partial sums of ||o - t + 1e-16||_2 over C."""
    ni = pl.program_id(1)   # batch index        (arbitrary)
    ti = pl.program_id(2)   # pixel-tile index   (arbitrary)

    @pl.when(jnp.logical_and(ni == 0, ti == 0))
    def _init():
        acc_ref[...] = jnp.zeros_like(acc_ref)

    o = out_ref[...].astype(jnp.float32)          # (1, C, R, 128)
    t = tgt_ref[...].astype(jnp.float32)
    diff = o - t + 1e-16
    # Channel reduction over a leading axis: (C-1) elementwise VPU adds.
    sq = jnp.sum(diff * diff, axis=(0, 1))        # (R, 128)
    # Per-lane partial sums; no cross-lane (XLU) reduce in the hot loop.
    acc_ref[...] += jnp.sqrt(sq)

    @pl.when(jnp.logical_and(ni == pl.num_programs(1) - 1,
                             ti == pl.num_programs(2) - 1))
    def _flush():
        part_ref[0] = acc_ref[...]


def epe_loss(output: jax.Array, target: jax.Array) -> jax.Array:
    """EPE loss for NCHW inputs: mean over pixels of the channel-wise L2 norm."""
    assert output.shape == target.shape
    n, c, h, w = output.shape
    hw = h * w
    p = n * hw  # number of norm vectors

    # --- tiling over the pixel axis -------------------------------------
    rows = -(-hw // _LANES)  # ceil(hw / 128) rows of 128 lanes per image
    r = min(_MAX_ROWS_PER_TILE,
            _round_up(max(1, -(-rows // _NUM_CORES)), _SUBLANES))
    rows_pad = _round_up(rows, r * _NUM_CORES)
    tiles_per_core = rows_pad // (r * _NUM_CORES)
    hw_pad = rows_pad * _LANES

    # --- layout: free reshapes, pad only when needed --------------------
    o3 = output.reshape(n, c, hw)
    t3 = target.reshape(n, c, hw)
    if hw_pad != hw:
        pad = hw_pad - hw
        # output pad = 0, target pad = 1e-16  =>  (o - t) + 1e-16 == 0 exactly,
        # so padded pixels contribute exactly zero to the norm sum.
        o3 = jnp.pad(o3, ((0, 0), (0, 0), (0, pad)))
        t3 = jnp.pad(t3, ((0, 0), (0, 0), (0, pad)), constant_values=1e-16)
    o4 = o3.reshape(n, c, rows_pad, _LANES)
    t4 = t3.reshape(n, c, rows_pad, _LANES)

    in_spec = pl.BlockSpec(
        (1, c, r, _LANES),
        lambda ci, ni, ti: (ni, 0, ci * tiles_per_core + ti, 0),
    )
    out_spec = pl.BlockSpec((1, r, _LANES), lambda ci, ni, ti: (ci, 0, 0))

    itemsize = jnp.dtype(output.dtype).itemsize
    cost = pl.CostEstimate(
        flops=5 * n * c * hw_pad,
        transcendentals=n * hw_pad,                      # one sqrt per pixel
        bytes_accessed=2 * n * c * hw_pad * itemsize
        + _NUM_CORES * r * _LANES * 4,
    )

    partials = pl.pallas_call(
        _epe_partial_kernel,
        out_shape=jax.ShapeDtypeStruct((_NUM_CORES, r, _LANES), jnp.float32),
        grid_spec=pltpu.PrefetchScalarGridSpec(
            num_scalar_prefetch=0,
            grid=(_NUM_CORES, n, tiles_per_core),
            in_specs=[in_spec, in_spec],
            out_specs=out_spec,
            scratch_shapes=[pltpu.VMEM((r, _LANES), jnp.float32)],
        ),
        compiler_params=pltpu.CompilerParams(
            dimension_semantics=("parallel", "arbitrary", "arbitrary"),
        ),
        cost_estimate=cost,
    )(o4, t4)

    # Single cross-lane reduce + mean, outside the kernel.  Result kept in f32.
    return jnp.sum(partials, dtype=jnp.float32) / jnp.float32(p)


def epe_loss_ref(output, target):
    diff = output - target + 1e-16
    norms = jnp.sqrt(jnp.sum(diff * diff, axis=1))
    return jnp.mean(norms)


if __name__ == "__main__":
    key = jax.random.PRNGKey(0)
    k1, k2 = jax.random.split(key)
    # Typical flow-like shapes: N=2, C=4, H=W=16.
    output = jax.random.normal(k1, (2, 4, 16, 16), dtype=jnp.float32)
    target = jax.random.normal(k2, (2, 4, 16, 16), dtype=jnp.float32)

    loss = jax.jit(epe_loss)(output, target)
    loss = jax.block_until_ready(loss)

    ref = epe_loss_ref(output, target)
    assert jnp.allclose(loss, ref, rtol=1e-5, atol=1e-6), (loss, ref)
    print("KERNEL_OK")
</pallas_src>

<mosaic_0001>
module attributes {stable_mosaic.version = 11 : i64} {
  func.func @_epe_partial_kernel(%arg0: i32, %arg1: i32, %arg2: i32, %arg3: memref<1x4x8x128xf32, #tpu.memory_space<vmem>>, %arg4: memref<1x4x8x128xf32, #tpu.memory_space<vmem>>, %arg5: memref<1x8x128xf32, #tpu.memory_space<vmem>>, %arg6: memref<8x128xf32, #tpu.memory_space<vmem>>) attributes {dimension_semantics = [#tpu.dimension_semantics<parallel>, #tpu.dimension_semantics<arbitrary>, #tpu.dimension_semantics<arbitrary>], iteration_bounds = array<i64: 2, 2, 1>, scalar_prefetch = 0 : i64, scratch_operands = 1 : i64, tpu.core_type = #tpu.core_type<tc>, window_params = [{transform_indices = @transform_0, window_bounds = array<i64: 1, 4, 8, 128>}, {transform_indices = @transform_1, window_bounds = array<i64: 1, 4, 8, 128>}, {transform_indices = @transform_2, window_bounds = array<i64: 1, 8, 128>}]} {
    %c0_i32 = arith.constant 0 : i32
    %0 = arith.cmpi eq, %arg1, %c0_i32 : i32
    %c0_i32_0 = arith.constant 0 : i32
    %1 = arith.cmpi eq, %arg2, %c0_i32_0 : i32
    %2 = arith.andi %0, %1 : i1
    %3 = arith.extui %2 : i1 to i32
    %c0_i32_1 = arith.constant 0 : i32
    %4 = arith.cmpi ne, %3, %c0_i32_1 : i32
    scf.if %4 {
      %cst_16 = arith.constant 0.000000e+00 : f32
      %21 = vector.broadcast %cst_16 : f32 to vector<8x128xf32>
      %c0_17 = arith.constant 0 : index
      %c0_18 = arith.constant 0 : index
      %22 = vector.load %arg6[%c0_17, %c0_18] : memref<8x128xf32, #tpu.memory_space<vmem>>, vector<8x128xf32>
      tpu.vector_store %arg6[%c0_17, %c0_18], %21 {strides = array<i32>} : memref<8x128xf32, #tpu.memory_space<vmem>>, vector<8x128xf32>,
    } else {
    }
    %c0 = arith.constant 0 : index
    %c0_2 = arith.constant 0 : index
    %c0_3 = arith.constant 0 : index
    %c0_4 = arith.constant 0 : index
    %5 = vector.load %arg3[%c0, %c0_2, %c0_3, %c0_4] : memref<1x4x8x128xf32, #tpu.memory_space<vmem>>, vector<1x4x8x128xf32>
    %c0_5 = arith.constant 0 : index
    %c0_6 = arith.constant 0 : index
    %c0_7 = arith.constant 0 : index
    %c0_8 = arith.constant 0 : index
    %6 = vector.load %arg4[%c0_5, %c0_6, %c0_7, %c0_8] : memref<1x4x8x128xf32, #tpu.memory_space<vmem>>, vector<1x4x8x128xf32>
    %7 = arith.subf %5, %6 : vector<1x4x8x128xf32>
    %cst = arith.constant 1.000000e-16 : f32
    %8 = vector.broadcast %cst : f32 to vector<1x4x8x128xf32>
    %9 = arith.addf %7, %8 : vector<1x4x8x128xf32>
    %10 = arith.mulf %9, %9 : vector<1x4x8x128xf32>
    %cst_9 = arith.constant dense<0.000000e+00> : vector<8x128xf32>
    %11 = vector.multi_reduction <add>, %10, %cst_9 [0, 1] : vector<1x4x8x128xf32> to vector<8x128xf32>
    %c0_10 = arith.constant 0 : index
    %c0_11 = arith.constant 0 : index
    %12 = vector.load %arg6[%c0_10, %c0_11] : memref<8x128xf32, #tpu.memory_space<vmem>>, vector<8x128xf32>
    %13 = math.sqrt %11 : vector<8x128xf32>
    %14 = arith.addf %12, %13 : vector<8x128xf32>
    %c0_12 = arith.constant 0 : index
    %c0_13 = arith.constant 0 : index
    %15 = vector.load %arg6[%c0_12, %c0_13] : memref<8x128xf32, #tpu.memory_space<vmem>>, vector<8x128xf32>
    tpu.vector_store %arg6[%c0_12, %c0_13], %14 {strides = array<i32>} : memref<8x128xf32, #tpu.memory_space<vmem>>, vector<8x128xf32>,
    %c1_i32 = arith.constant 1 : i32
    %16 = arith.cmpi eq, %arg1, %c1_i32 : i32
    %c0_i32_14 = arith.constant 0 : i32
    %17 = arith.cmpi eq, %arg2, %c0_i32_14 : i32
    %18 = arith.andi %16, %17 : i1
    %19 = arith.extui %18 : i1 to i32
    %c0_i32_15 = arith.constant 0 : i32
    %20 = arith.cmpi ne, %19, %c0_i32_15 : i32
    scf.if %20 {
      %c0_16 = arith.constant 0 : index
      %c0_17 = arith.constant 0 : index
      %21 = vector.load %arg6[%c0_16, %c0_17] : memref<8x128xf32, #tpu.memory_space<vmem>>, vector<8x128xf32>
      %c0_18 = arith.constant 0 : index
      %c0_19 = arith.constant 0 : index
      %c0_20 = arith.constant 0 : index
      %22 = vector.load %arg5[%c0_18, %c0_19, %c0_20] : memref<1x8x128xf32, #tpu.memory_space<vmem>>, vector<1x8x128xf32>
      %23 = vector.shape_cast %22 : vector<1x8x128xf32> to vector<8x128xf32>
      %24 = vector.shape_cast %21 : vector<8x128xf32> to vector<1x8x128xf32>
      tpu.vector_store %arg5[%c0_18, %c0_19, %c0_20], %24 {strides = array<i32>} : memref<1x8x128xf32, #tpu.memory_space<vmem>>, vector<1x8x128xf32>,
    } else {
    }
    return
  }
  func.func @transform_0(%arg0: i32, %arg1: i32, %arg2: i32) -> (i32, i32, i32, i32) {
    %c1_i32 = arith.constant 1 : i32
    %0 = arith.muli %arg0, %c1_i32 : i32
    %1 = arith.addi %0, %arg2 : i32
    %c0_i32 = arith.constant 0 : i32
    %c0_i32_0 = arith.constant 0 : i32
    %c0_i32_1 = arith.constant 0 : i32
    return %arg1, %c0_i32, %1, %c0_i32_0 : i32, i32, i32, i32
  }
  func.func @transform_1(%arg0: i32, %arg1: i32, %arg2: i32) -> (i32, i32, i32, i32) {
    %c1_i32 = arith.constant 1 : i32
    %0 = arith.muli %arg0, %c1_i32 : i32
    %1 = arith.addi %0, %arg2 : i32
    %c0_i32 = arith.constant 0 : i32
    %c0_i32_0 = arith.constant 0 : i32
    %c0_i32_1 = arith.constant 0 : i32
    return %arg1, %c0_i32, %1, %c0_i32_0 : i32, i32, i32, i32
  }
  func.func @transform_2(%arg0: i32, %arg1: i32, %arg2: i32) -> (i32, i32, i32) {
    %c0_i32 = arith.constant 0 : i32
    %c0_i32_0 = arith.constant 0 : i32
    %c0_i32_1 = arith.constant 0 : i32
    return %arg0, %c0_i32, %c0_i32_0 : i32, i32, i32
  }
}

</mosaic_0001>

<llo_original>
// kernel: epe_loss.1
$region0: #{epe_loss.1}
  #allocation0 [shape = 'u32[]', space=smem, size = 0x4, offset = 0x4, fixed_abs, tag = 'smem constant byte address 0x4 - core index']
  #allocation1 [shape = 'u32[144,128]{1,0:T(1,128)}', space=vmem, size = 0x12000, scoped, tag = 'internal scratch']
  #allocation2 [shape = 'f32[8,128]{1,0:T(8,128)}', space=vmem, size = 0x1000, scoped, tag = 'scratch operand']
  %s0 = inlined_call_operand.vmem [shape: f32[2,4,16,128], index: 0, kind: input, shape index: {}]
  %s1 = inlined_call_operand.vmem [shape: f32[2,4,16,128], index: 1, kind: input, shape index: {}]
  %s2 = inlined_call_operand.vmem [shape: f32[2,8,128], index: 2, kind: output, shape index: {}]
  %s3 = sld [smem:[#allocation0]]
  $region125: #{epe_loss.1} parent=0
    _
  %s5 = ssub.s32 1, %s3
  %s6 = scalar_select 0, %s5, %s3
  $region1: #{epe_loss.1} parent=0
    #allocation3 [shape = 'u8[32768]{0}', space=vmem, size = 0x8000, scoped, tag = 'input window, operand 0']
    #allocation4 [shape = 'u8[32768]{0}', space=vmem, size = 0x8000, scoped, tag = 'input window, operand 1']
    loop: start=0, step=1, limit=6
    $region2: #{epe_loss.1} parent=1 // loop_pre_header
      _
    $region3: #{epe_loss.1} parent=1 // loop_header
      %s8 = sphi 0, %s12
      %p9 = scmp.ge.s32.totalorder %s8, 6
      %s15 = sphi 0, %s34
      %s16 = sphi 0, %s30
      %s17 = sphi 0, %s26
      %s18 = sphi 0, %s15
      %s19 = sphi 0, %s16
      %s20 = sphi 0, %s17
      %s21 = sphi 0, %s18
      %s22 = sphi 0, %s19
      %s23 = sphi 0, %s20
      %s41 = sphi 0, %s43
      %s44 = sphi 0, %s41
      %s45 = sphi 0, %s44
      %s61 = sphi 0, %s45
      %s71 = sphi 0, %s73
      %s74 = sphi 0, %s71
      %s75 = sphi 0, %s74
      %s91 = sphi 0, %s75
      %s97 = sphi 0, %s99
      %s100 = sphi 0, %s97
      %s101 = sphi 0, %s100
      %s117 = sphi 0, %s101
    $region4: #{epe_loss.1} parent=1 // loop_header_branch
      %11 = sbr.rel (%p9) target = $region8
    $region5: #{epe_loss.1} parent=1 // loop_body
      %s13 = ssub.s32 %s8, 1
      %s14 = ssub.s32 %s8, 2
      %s24 = sadd.s32 1, %s17
      %p25 = scmp.ge.s32.totalorder %s24, 1
      %s26 = scalar_select %p25, 0, %s24
      %s27 = sadd.s32 1, %s16
      %s28 = scalar_select %p25, %s27, %s16
      %p29 = scmp.ge.s32.totalorder %s28, 2
      %s30 = scalar_select %p29, 0, %s28
      %s31 = sadd.s32 1, %s15
      %s32 = scalar_select %p29, %s31, %s15
      %p33 = scmp.ge.s32.totalorder %s32, 2
      %s34 = scalar_select %p33, 0, %s32
      %s35 = sadd.s32 %s15, %s17
      %s36 = sadd.s32 %s34, %s26
      %s37 = ssub.s32 %s16, %s30
      %s38 = ssub.s32 %s35, %s36
      %s39 = sor.u32 %s37, %s38
      %p40 = scmp.eq.s32.totalorder %s39, 0
      %s42 = sadd.s32 %s41, 1
      %s43 = scalar_select %p40, %s41, %s42
      %p46 = pneg %p40
      %p47 = scmp.eq.s32.totalorder %s8, 3
      %p48 = por %p46, %p47
      %p49 = scmp.ne.s32.totalorder %s41, %s44
      %p50 = scmp.eq.s32.totalorder %s8, 0
      %p51 = por %p49, %p50
      %p52 = scmp.ne.s32.totalorder %s41, %s44
      %p53 = scmp.eq.s32.totalorder %s13, 3
      %p54 = por %p52, %p53
      %p55 = scmp.ne.s32.totalorder %s44, %s45
      %p56 = scmp.eq.s32.totalorder %s13, 0
      %p57 = por %p55, %p56
      %p58 = scmp.ne.s32.totalorder %s44, %s45
      %p59 = scmp.eq.s32.totalorder %s14, 3
      %p60 = por %p58, %p59
      %p62 = scmp.ne.s32.totalorder %s45, %s61
      %p63 = scmp.eq.s32.totalorder %s14, 0
      %p64 = por %p62, %p63
      %s65 = sadd.s32 %s15, %s17
      %s66 = sadd.s32 %s34, %s26
      %s67 = ssub.s32 %s16, %s30
      %s68 = ssub.s32 %s65, %s66
      %s69 = sor.u32 %s67, %s68
      %p70 = scmp.eq.s32.totalorder %s69, 0
      %s72 = sadd.s32 %s71, 1
      %s73 = scalar_select %p70, %s71, %s72
      %p76 = pneg %p70
      %p77 = scmp.eq.s32.totalorder %s8, 3
      %p78 = por %p76, %p77
      %p79 = scmp.ne.s32.totalorder %s71, %s74
      %p80 = scmp.eq.s32.totalorder %s8, 0
      %p81 = por %p79, %p80
      %p82 = scmp.ne.s32.totalorder %s71, %s74
      %p83 = scmp.eq.s32.totalorder %s13, 3
      %p84 = por %p82, %p83
      %p85 = scmp.ne.s32.totalorder %s74, %s75
      %p86 = scmp.eq.s32.totalorder %s13, 0
      %p87 = por %p85, %p86
      %p88 = scmp.ne.s32.totalorder %s74, %s75
      %p89 = scmp.eq.s32.totalorder %s14, 3
      %p90 = por %p88, %p89
      %p92 = scmp.ne.s32.totalorder %s75, %s91
      %p93 = scmp.eq.s32.totalorder %s14, 0
      %p94 = por %p92, %p93
      %s95 = ssub.s32 %s15, %s34
      %p96 = scmp.eq.s32.totalorder %s95, 0
      %s98 = sadd.s32 %s97, 1
      %s99 = scalar_select %p96, %s97, %s98
      %p102 = pneg %p96
      %p103 = scmp.eq.s32.totalorder %s8, 3
      %p104 = por %p102, %p103
      %p105 = scmp.ne.s32.totalorder %s97, %s100
      %p106 = scmp.eq.s32.totalorder %s8, 0
      %p107 = por %p105, %p106
      %p108 = scmp.ne.s32.totalorder %s97, %s100
      %p109 = scmp.eq.s32.totalorder %s13, 3
      %p110 = por %p108, %p109
      %p111 = scmp.ne.s32.totalorder %s100, %s101
      %p112 = scmp.eq.s32.totalorder %s13, 0
      %p113 = por %p111, %p112
      %p114 = scmp.ne.s32.totalorder %s100, %s101
      %p115 = scmp.eq.s32.totalorder %s14, 3
      %p116 = por %p114, %p115
      %p118 = scmp.ne.s32.totalorder %s101, %s117
      %p119 = scmp.eq.s32.totalorder %s14, 0
      %p120 = por %p118, %p119
      %p121 = scmp.le.s32.totalorder 1, %s8
      %p122 = scmp.lt.s32.totalorder %s8, 5
      %p123 = pnand %p121, %p122
      %p124 = pneg %p123
      // Predicated region
      $region9: #{epe_loss.1} parent=5 // pred_check
        _
      $region10: #{epe_loss.1} parent=5 // pred_check_branch
        %126 = sbr.rel (%p123) target = $region12
      $region11: #{epe_loss.1} parent=5 // pred_region
        %s127 = ssub.s32 %s8, 1
      $region12: #{epe_loss.1} parent=5 // pred_fallthru
        _
      %p128 = scmp.lt.s32.totalorder %s8, 4
      // Predicated region
      $region13: #{epe_loss.1} parent=5 // pred_check
        %p129 = pneg %p128
      $region14: #{epe_loss.1} parent=5 // pred_check_branch
        %131 = sbr.rel (%p129) target = $region16
      $region15: #{epe_loss.1} parent=5 // pred_region
        // Predicated region
        $region17: #{epe_loss.1} parent=15 // pred_check
          %p132 = pneg %p51
        $region18: #{epe_loss.1} parent=15 // pred_check_branch
          %134 = sbr.rel (%p132) target = $region20
        $region19: #{epe_loss.1} parent=15 // pred_region
          %s135 = sand.u32 %s41, 1
          %s136 = sand.u32 %s41, 1
          %s137 = smul.addr %s136, 32
          %s138 = scalar_lea.vmem [#allocation3], %s137
          %s139 = sadd.s32 %s15, %s17
          %s140 = smul.addr %s16, 8
          %s141 = sadd.s32 %s139, %s140
          %s142 = smul.addr %s141, 8
          %s143 = scalar_lea.vmem %s0, %s142
          // Predicated region
          $region21: #{epe_loss.1} parent=19 // pred_check
            _
          $region22: #{epe_loss.1} parent=19 // pred_check_branch
            %145 = sbr.rel (0) target = $region24
          $region23: #{epe_loss.1} parent=19 // pred_region
            // Predicated region
            $region25: #{epe_loss.1} parent=23 // pred_check
              _
            $region26: #{epe_loss.1} parent=23 // pred_check_branch
              %147 = sbr.rel (0) target = $region28
            $region27: #{epe_loss.1} parent=23 // pred_region
              // Predicated region
              $region40: #{epe_loss.1} parent=27 // pred_check
                _
              $region41: #{epe_loss.1} parent=27 // pred_check_branch
                %168 = sbr.rel (0) target = $region43
              $region42: #{epe_loss.1} parent=27 // pred_region
                loop: start=0, step=1, limit=1
                $region44: #{epe_loss.1} parent=42 // loop_pre_header
                  _
                $region45: #{epe_loss.1} parent=42 // loop_header
                  %s170 = sphi 0, %s174
                  %p171 = scmp.ge.s32.totalorder %s170, 1
                  %s175 = sphi %s143, %s143
                  %s176 = sphi %s138, %s138
                $region46: #{epe_loss.1} parent=42 // loop_header_branch
                  %173 = sbr.rel (%p171) target = $region50
                $region47: #{epe_loss.1} parent=42 // loop_body
                  %v177 = vld [vmem:[%s175] sm:$0xff]
                  %178 = vst [vmem:[%s176] sm:$0xff] %v177
                  %v179 = vld [vmem:[%s175 + $0x10] sm:$0xff]
                  %180 = vst [vmem:[%s176 + $0x8] sm:$0xff] %v179
                  %v181 = vld [vmem:[%s175 + $0x20] sm:$0xff]
                  %182 = vst [vmem:[%s176 + $0x10] sm:$0xff] %v181
                  %v183 = vld [vmem:[%s175 + $0x30] sm:$0xff]
                  %184 = vst [vmem:[%s176 + $0x18] sm:$0xff] %v183
                $region48: #{epe_loss.1} parent=42 // loop_footer
                  %s174 = sadd.s32 1, %s170
                $region49: #{epe_loss.1} parent=42 // loop_footer_branch
                  %169 = sbr.rel target = $region45
                $region50: #{epe_loss.1} parent=42 // loop_exit
                  _
              $region43: #{epe_loss.1} parent=27 // pred_fallthru
                _
              // Predicated region
              $region51: #{epe_loss.1} parent=27 // pred_check
                _
              $region52: #{epe_loss.1} parent=27 // pred_check_branch
                %186 = sbr.rel target = $region54
              $region53: #{epe_loss.1} parent=27 // pred_region
                _
              $region54: #{epe_loss.1} parent=27 // pred_fallthru
                _
            $region28: #{epe_loss.1} parent=23 // pred_fallthru
              _
            // Predicated region
            $region29: #{epe_loss.1} parent=23 // pred_check
              _
            $region30: #{epe_loss.1} parent=23 // pred_check_branch
              %149 = sbr.rel target = $region32
            $region31: #{epe_loss.1} parent=23 // pred_region
              loop: start=0, step=1, limit=1
              $region33: #{epe_loss.1} parent=31 // loop_pre_header
                _
              $region34: #{epe_loss.1} parent=31 // loop_header
                %s152 = sphi 0, %s156
                %p153 = scmp.ge.s32.totalorder %s152, 1
                %s157 = sphi %s143, %s143
                %s158 = sphi %s138, %s138
              $region35: #{epe_loss.1} parent=31 // loop_header_branch
                %155 = sbr.rel (%p153) target = $region39
              $region36: #{epe_loss.1} parent=31 // loop_body
                %v159 = vld [vmem:[%s157] sm:$0xff]
                %160 = vst [vmem:[%s158] sm:$0xff] %v159
                %v161 = vld [vmem:[%s157 + $0x10] sm:$0xff]
                %162 = vst [vmem:[%s158 + $0x8] sm:$0xff] %v161
                %v163 = vld [vmem:[%s157 + $0x20] sm:$0xff]
                %164 = vst [vmem:[%s158 + $0x10] sm:$0xff] %v163
                %v165 = vld [vmem:[%s157 + $0x30] sm:$0xff]
                %166 = vst [vmem:[%s158 + $0x18] sm:$0xff] %v165
              $region37: #{epe_loss.1} parent=31 // loop_footer
                %s156 = sadd.s32 1, %s152
              $region38: #{epe_loss.1} parent=31 // loop_footer_branch
                %151 = sbr.rel target = $region34
              $region39: #{epe_loss.1} parent=31 // loop_exit
                _
            $region32: #{epe_loss.1} parent=23 // pred_fallthru
              _
          $region24: #{epe_loss.1} parent=19 // pred_fallthru
            _
          %187 = vnop
        $region20: #{epe_loss.1} parent=15 // pred_fallthru
          _
        // Predicated region
        $region55: #{epe_loss.1} parent=15 // pred_check
          %p188 = pneg %p81
        $region56: #{epe_loss.1} parent=15 // pred_check_branch
          %190 = sbr.rel (%p188) target = $region58
        $region57: #{epe_loss.1} parent=15 // pred_region
          %s191 = sand.u32 %s71, 1
          %s192 = sand.u32 %s71, 1
          %s193 = smul.addr %s192, 32
          %s194 = scalar_lea.vmem [#allocation4], %s193
          %s195 = sadd.s32 %s15, %s17
          %s196 = smul.addr %s16, 8
          %s197 = sadd.s32 %s195, %s196
          %s198 = smul.addr %s197, 8
          %s199 = scalar_lea.vmem %s1, %s198
          // Predicated region
          $region59: #{epe_loss.1} parent=57 // pred_check
            _
          $region60: #{epe_loss.1} parent=57 // pred_check_branch
            %201 = sbr.rel (0) target = $region62
          $region61: #{epe_loss.1} parent=57 // pred_region
            // Predicated region
            $region63: #{epe_loss.1} parent=61 // pred_check
              _
            $region64: #{epe_loss.1} parent=61 // pred_check_branch
              %203 = sbr.rel (0) target = $region66
            $region65: #{epe_loss.1} parent=61 // pred_region
              // Predicated region
              $region78: #{epe_loss.1} parent=65 // pred_check
                _
              $region79: #{epe_loss.1} parent=65 // pred_check_branch
                %224 = sbr.rel (0) target = $region81
              $region80: #{epe_loss.1} parent=65 // pred_region
                loop: start=0, step=1, limit=1
                $region82: #{epe_loss.1} parent=80 // loop_pre_header
                  _
                $region83: #{epe_loss.1} parent=80 // loop_header
                  %s226 = sphi 0, %s230
                  %p227 = scmp.ge.s32.totalorder %s226, 1
                  %s231 = sphi %s199, %s199
                  %s232 = sphi %s194, %s194
                $region84: #{epe_loss.1} parent=80 // loop_header_branch
                  %229 = sbr.rel (%p227) target = $region88
                $region85: #{epe_loss.1} parent=80 // loop_body
                  %v233 = vld [vmem:[%s231] sm:$0xff]
                  %234 = vst [vmem:[%s232] sm:$0xff] %v233
                  %v235 = vld [vmem:[%s231 + $0x10] sm:$0xff]
                  %236 = vst [vmem:[%s232 + $0x8] sm:$0xff] %v235
                  %v237 = vld [vmem:[%s231 + $0x20] sm:$0xff]
                  %238 = vst [vmem:[%s232 + $0x10] sm:$0xff] %v237
                  %v239 = vld [vmem:[%s231 + $0x30] sm:$0xff]
                  %240 = vst [vmem:[%s232 + $0x18] sm:$0xff] %v239
                $region86: #{epe_loss.1} parent=80 // loop_footer
                  %s230 = sadd.s32 1, %s226
                $region87: #{epe_loss.1} parent=80 // loop_footer_branch
                  %225 = sbr.rel target = $region83
                $region88: #{epe_loss.1} parent=80 // loop_exit
                  _
              $region81: #{epe_loss.1} parent=65 // pred_fallthru
                _
              // Predicated region
              $region89: #{epe_loss.1} parent=65 // pred_check
                _
              $region90: #{epe_loss.1} parent=65 // pred_check_branch
                %242 = sbr.rel target = $region92
              $region91: #{epe_loss.1} parent=65 // pred_region
                _
              $region92: #{epe_loss.1} parent=65 // pred_fallthru
                _
            $region66: #{epe_loss.1} parent=61 // pred_fallthru
              _
            // Predicated region
            $region67: #{epe_loss.1} parent=61 // pred_check
              _
            $region68: #{epe_loss.1} parent=61 // pred_check_branch
              %205 = sbr.rel target = $region70
            $region69: #{epe_loss.1} parent=61 // pred_region
              loop: start=0, step=1, limit=1
              $region71: #{epe_loss.1} parent=69 // loop_pre_header
                _
              $region72: #{epe_loss.1} parent=69 // loop_header
                %s208 = sphi 0, %s212
                %p209 = scmp.ge.s32.totalorder %s208, 1
                %s213 = sphi %s199, %s199
                %s214 = sphi %s194, %s194
              $region73: #{epe_loss.1} parent=69 // loop_header_branch
                %211 = sbr.rel (%p209) target = $region77
              $region74: #{epe_loss.1} parent=69 // loop_body
                %v215 = vld [vmem:[%s213] sm:$0xff]
                %216 = vst [vmem:[%s214] sm:$0xff] %v215
                %v217 = vld [vmem:[%s213 + $0x10] sm:$0xff]
                %218 = vst [vmem:[%s214 + $0x8] sm:$0xff] %v217
                %v219 = vld [vmem:[%s213 + $0x20] sm:$0xff]
                %220 = vst [vmem:[%s214 + $0x10] sm:$0xff] %v219
                %v221 = vld [vmem:[%s213 + $0x30] sm:$0xff]
                %222 = vst [vmem:[%s214 + $0x18] sm:$0xff] %v221
              $region75: #{epe_loss.1} parent=69 // loop_footer
                %s212 = sadd.s32 1, %s208
              $region76: #{epe_loss.1} parent=69 // loop_footer_branch
                %207 = sbr.rel target = $region72
              $region77: #{epe_loss.1} parent=69 // loop_exit
                _
            $region70: #{epe_loss.1} parent=61 // pred_fallthru
              _
          $region62: #{epe_loss.1} parent=57 // pred_fallthru
            _
          %243 = vnop
        $region58: #{epe_loss.1} parent=15 // pred_fallthru
          _
      $region16: #{epe_loss.1} parent=5 // pred_fallthru
        _
      %p244 = scmp.le.s32.totalorder 1, %s8
      %p245 = scmp.lt.s32.totalorder %s8, 5
      %p246 = pnand %p244, %p245
      %p247 = pneg %p246
      // Predicated region
      $region93: #{epe_loss.1} parent=5 // pred_check
        _
      $region94: #{epe_loss.1} parent=5 // pred_check_branch
        %249 = sbr.rel (%p246) target = $region96
      $region95: #{epe_loss.1} parent=5 // pred_region
        %s250 = ssub.s32 %s8, 1
        %s251 = sand.u32 %s44, 1
        %s252 = sand.u32 %s44, 1
        %s253 = smul.addr %s252, 32
        %s254 = scalar_lea.vmem [#allocation3], %s253
        // Predicated region
        $region97: #{epe_loss.1} parent=95 // pred_check
          %p255 = pneg %p57
        $region98: #{epe_loss.1} parent=95 // pred_check_branch
          %257 = sbr.rel (%p255) target = $region100
        $region99: #{epe_loss.1} parent=95 // pred_region
          _
        $region100: #{epe_loss.1} parent=95 // pred_fallthru
          _
        %s258 = sand.u32 %s74, 1
        %s259 = sand.u32 %s74, 1
        %s260 = smul.addr %s259, 32
        %s261 = scalar_lea.vmem [#allocation4], %s260
        // Predicated region
        $region101: #{epe_loss.1} parent=95 // pred_check
          %p262 = pneg %p87
        $region102: #{epe_loss.1} parent=95 // pred_check_branch
          %264 = sbr.rel (%p262) target = $region104
        $region103: #{epe_loss.1} parent=95 // pred_region
          _
        $region104: #{epe_loss.1} parent=95 // pred_fallthru
          _
        %s265 = sand.u32 %s44, 1
        %s266 = sand.u32 %s44, 1
        %s267 = smul.addr %s266, 32
        %s268 = scalar_lea.vmem [#allocation3], %s267
        %p269 = pneg %p57
        %p270 = pneg %p54
        %s271 = sand.u32 %s74, 1
        %s272 = sand.u32 %s74, 1
        %s273 = smul.addr %s272, 32
        %s274 = scalar_lea.vmem [#allocation4], %s273
        %p275 = pneg %p87
        %p276 = pneg %p84
        %p277 = pneg %p113
        %p278 = pneg %p110
        %p279 = scmp.lt.s32.totalorder %s18, 1
        %s280 = scalar_select %p279, %s18, 1
        %s281 = smul.addr %s280, 8
        %s282 = scalar_lea.vmem %s2, %s281
        %s283 = sadd.s32 %s18, %s20
        %s284 = sadd.s32 %s18, %s20
        %p285 = scmp.lt.s32.totalorder %s18, 1
        %s286 = scalar_select %p285, %s18, 1
        %s287 = smul.addr %s286, 8
        %s288 = scalar_lea.vmem %s2, %s287
        %p289 = scmp.eq.s32.totalorder %s19, 0
        %p290 = scmp.eq.s32.totalorder %s20, 0
        %p291 = pnand %p289, %p290
        %p292 = pneg %p291
        // Predicated region
        $region105: #{epe_loss.1} parent=95 // pred_check
          _
        $region106: #{epe_loss.1} parent=95 // pred_check_branch
          %294 = sbr.rel (%p291) target = $region108
        $region107: #{epe_loss.1} parent=95 // pred_region
          %295 = vst [vmem:[#allocation2] sm:$0xff] 0.0
        $region108: #{epe_loss.1} parent=95 // pred_fallthru
          _
        %v296 = vld [vmem:[%s254] sm:$0xff]
        %v297 = vld [vmem:[%s254 + $0x8] sm:$0xff]
        %v298 = vld [vmem:[%s254 + $0x10] sm:$0xff]
        %v299 = vld [vmem:[%s254 + $0x18] sm:$0xff]
        %v300 = vld [vmem:[%s261] sm:$0xff]
        %v301 = vld [vmem:[%s261 + $0x8] sm:$0xff]
        %v302 = vld [vmem:[%s261 + $0x10] sm:$0xff]
        %v303 = vld [vmem:[%s261 + $0x18] sm:$0xff]
        %v304 = vsub.f32 %v296, %v300
        %v305 = vsub.f32 %v297, %v301
        %v306 = vsub.f32 %v298, %v302
        %v307 = vsub.f32 %v299, %v303
        %v308 = vadd.f32 %v304, 1e-16
        %v309 = vadd.f32 %v305, 1e-16
        %v310 = vadd.f32 %v306, 1e-16
        %v311 = vadd.f32 %v307, 1e-16
        %v312 = vmul.f32 %v308, %v308
        %v313 = vmul.f32 %v309, %v309
        %v314 = vmul.f32 %v310, %v310
        %v315 = vmul.f32 %v311, %v311
        %v316 = vadd.f32 %v312, %v313
        %v317 = vadd.f32 %v316, %v314
        %v318 = vadd.f32 %v317, %v315
        %v319 = vld [vmem:[#allocation2] sm:$0xff]
        %v320 = vrsqrt.pop %v318
        %v321 = vmul.f32 %v318, %v320
        %vm322 = vcmp.eq.f32.partialorder %v318, inf
        %v323 = vsel %vm322, %v318, %v321
        %vm324 = vcmp.eq.f32.partialorder %v318, 0.0
        %v325 = vand.u32 %v318, 2147483648
        %v326 = vsel %vm324, %v325, %v323
        %v327 = vadd.f32 %v319, %v326
        %328 = vst [vmem:[#allocation2] sm:$0xff] %v327
        %p329 = scmp.eq.s32.totalorder %s19, 1
        %p330 = pnand %p329, %p290
        %p331 = pneg %p330
        // Predicated region
        $region109: #{epe_loss.1} parent=95 // pred_check
          _
        $region110: #{epe_loss.1} parent=95 // pred_check_branch
          %333 = sbr.rel (%p330) target = $region112
        $region111: #{epe_loss.1} parent=95 // pred_region
          %v334 = vld [vmem:[#allocation2] sm:$0xff]
          %335 = vst [vmem:[%s288] sm:$0xff] %v334
        $region112: #{epe_loss.1} parent=95 // pred_fallthru
          _
        %p336 = scmp.lt.s32.totalorder %s18, 1
        %s337 = scalar_select %p336, %s18, 1
        %s338 = smul.addr %s337, 8
        %s339 = scalar_lea.vmem %s2, %s338
        // Predicated region
        $region113: #{epe_loss.1} parent=95 // pred_check
          %p340 = pneg %p110
        $region114: #{epe_loss.1} parent=95 // pred_check_branch
          %342 = sbr.rel (%p340) target = $region116
        $region115: #{epe_loss.1} parent=95 // pred_region
          _
        $region116: #{epe_loss.1} parent=95 // pred_fallthru
          _
      $region96: #{epe_loss.1} parent=5 // pred_fallthru
        _
      %p343 = scmp.le.s32.totalorder 2, %s8
      // Predicated region
      $region117: #{epe_loss.1} parent=5 // pred_check
        %p344 = pneg %p343
      $region118: #{epe_loss.1} parent=5 // pred_check_branch
        %346 = sbr.rel (%p344) target = $region120
      $region119: #{epe_loss.1} parent=5 // pred_region
        %s347 = ssub.s32 %s8, 2
        // Predicated region
        $region121: #{epe_loss.1} parent=119 // pred_check
          %p348 = pneg %p116
        $region122: #{epe_loss.1} parent=119 // pred_check_branch
          %350 = sbr.rel (%p348) target = $region124
        $region123: #{epe_loss.1} parent=119 // pred_region
          %p351 = scmp.lt.s32.totalorder %s21, 1
          %s352 = scalar_select %p351, %s21, 1
          %s353 = smul.addr %s352, 8
          %s354 = scalar_lea.vmem %s2, %s353
        $region124: #{epe_loss.1} parent=119 // pred_fallthru
          _
      $region120: #{epe_loss.1} parent=5 // pred_fallthru
        _
    $region6: #{epe_loss.1} parent=1 // loop_footer
      %s12 = sadd.s32 1, %s8
    $region7: #{epe_loss.1} parent=1 // loop_footer_branch
      %7 = sbr.rel target = $region3
    $region8: #{epe_loss.1} parent=1 // loop_exit
      _

</llo_original>
